<compile_context>
chip_gen: v6e
topology: v6e:2x2x1
jax: 0.10.0
libtpu: 0.0.40
codegen_flags: <defaults>
</compile_context>

<pallas_src>
import functools

import jax
import jax.numpy as jnp
from jax.experimental import pallas as pl
from jax.experimental.pallas import tpu as pltpu

EPS = 1e-15  # matches nff's norm(): ((vec**2 + EPS).sum(-1))**0.5


def _round_up(x, m):
    return ((x + m - 1) // m) * m


def _cdiv(a, b):
    return (a + b - 1) // b


def _pick_tm(N, F, itemsize, tm):
    """Pick the row-tile size (multiple of 8) under a v7x-safe VMEM budget."""
    n8 = _round_up(max(N, 1), 8)
    if tm is not None:
        return max(8, min(_round_up(tm, 8), n8))
    # Rough VMEM bytes per tile row: double-buffered s / vt / out streams plus the
    # f32 intermediates (wv1, norm, cat, h).  Budgeted for v7x's 64 MiB VMEM.
    per_row = (3 * F * itemsize * 2      # vt tile, double-buffered
               + F * itemsize * 2        # s tile, double-buffered
               + 4 * 4 * 2               # packed (TM, 4) output, double-buffered
               + 3 * F * 4               # wv1 (f32)
               + F * 4                   # norm (f32)
               + 2 * F * itemsize        # cat
               + F * 4)                  # h (f32)
    budget = 40 * 1024 * 1024
    tm_cap = max(8, (budget // per_row) // 8 * 8)
    tm_val = min(1024, n8, tm_cap)
    # Prefer >= 2 grid steps so ("parallel",) can use both v7x TensorCores.
    if n8 > 16 and _cdiv(N, tm_val) < 2:
        tm_val = min(tm_val, max(8, _round_up(_cdiv(n8, 2), 8)))
    return tm_val


def gated_equivariant_kernel(s_ref, vt_ref, w1t_ref, w2_ref, b1wt_ref, b1b_ref,
                             b2wt_ref, b2b_ref, out_ref):
    TM, F = s_ref.shape                         # block shapes are static

    # --- W1 matmul over all 3 spatial components in a single MXU stream ----------
    # vt block: (3, TM, F) -> (3*TM, F);  w1t: (F, F) = W1.T;  f32 accumulation.
    v_all = vt_ref[...]                                     # (3, TM, F) mm_dtype
    v_flat = v_all.reshape(3 * TM, F)
    wv1 = jnp.dot(v_flat, w1t_ref[...],
                  preferred_element_type=jnp.float32)       # (3*TM, F) f32

    wv1_x = wv1[0 * TM:1 * TM, :]
    wv1_y = wv1[1 * TM:2 * TM, :]
    wv1_z = wv1[2 * TM:3 * TM, :]
    # norm over the spatial axis: sqrt(sum_l (wv1_l**2 + EPS)) == sqrt(sum + 3*EPS)
    norm_wv1 = jnp.sqrt(wv1_x * wv1_x + wv1_y * wv1_y + wv1_z * wv1_z + 3.0 * EPS)

    # --- gating MLP: Dense(2F->F, bias) -> swish -> Dense(F->2, bias) --------------
    # cat stays in the matmul input dtype (no f32 round-trip on s).
    cat = jnp.concatenate([norm_wv1.astype(s_ref.dtype), s_ref[...]], axis=-1)
    h = (jnp.dot(cat, b1wt_ref[...], preferred_element_type=jnp.float32)
         + b1b_ref[...])                                    # (TM, F) f32
    h = h * jax.nn.sigmoid(h)                               # swish / SiLU
    out2 = (jnp.dot(h, b2wt_ref[...], preferred_element_type=jnp.float32)
            + b2b_ref[...])                                 # (TM, 2) f32
    gate = out2[:, 0:1]                                     # split[0]
    new_s = out2[:, 1:2]                                    # split[1]

    # --- w_v_2 = <W2, v> per spatial component: VPU multiply + lane reduction -----
    # Keeps the main MXU output exactly F lanes wide (no v5e F+1 -> 2x128-tile tax).
    w2 = w2_ref[...]                                        # (1, F) f32
    wv2_x = jnp.sum(v_all[0].astype(jnp.float32) * w2, axis=-1, keepdims=True)
    wv2_y = jnp.sum(v_all[1].astype(jnp.float32) * w2, axis=-1, keepdims=True)
    wv2_z = jnp.sum(v_all[2].astype(jnp.float32) * w2, axis=-1, keepdims=True)
    new_v = gate * jnp.concatenate([wv2_x, wv2_y, wv2_z], axis=-1)  # (TM, 3)

    # Single lane-dense store: [new_s, v_x, v_y, v_z]
    out_ref[...] = jnp.concatenate([new_s, new_v], axis=-1).astype(out_ref.dtype)


@functools.partial(jax.jit, static_argnames=("v_layout", "mm_dtype", "tm"))
def gated_equivariant(s_i, v_i, params, *, v_layout="nf3",
                      mm_dtype=jnp.bfloat16, tm=None):
    """GatedEquivariant forward.

    s_i: (N, F) f32.
    v_i: (N, F, 3) f32 if v_layout == "nf3" (PyTorch layout; needs an HBM transpose
         pass), or (3, N, F) f32 if v_layout == "3nf" (preferred, no extra HBM pass).
    mm_dtype: dtype for MXU inputs.  Default bf16 (f32 accumulation); f32 is exact.
    Returns (new_s (N, 1), new_v (N, 3)), both f32.
    """
    N, F = s_i.shape

    if v_layout == "nf3":
        # Full HBM read+write of the largest tensor (~6*N*F*4 bytes): >2x end-to-end
        # cost vs. the "3nf" path for this memory-bound kernel.  Prefer "3nf".
        vt = jnp.transpose(v_i, (2, 0, 1))                  # (3, N, F)
    elif v_layout == "3nf":
        vt = v_i                                            # already (3, N, F)
    else:
        raise ValueError(f"unknown v_layout {v_layout!r}")

    mm_dtype = jnp.dtype(mm_dtype)
    TM = _pick_tm(N, F, mm_dtype.itemsize, tm)
    # No padding: partial last block reads/writes OOB rows; safe because the
    # computation is strictly per-row and OOB output rows are dropped.
    grid = (pl.cdiv(N, TM),)

    # --- weight prep -----------------------------------------------------------
    W1, W2 = params["W1"], params["W2"]                     # (F, F), (1, F)
    b1w, b1b = params["b1w"], params["b1b"]                 # (F, 2F), (F,)
    b2w, b2b = params["b2w"], params["b2b"]                 # (2, F), (2,)

    w1t = W1.T.astype(mm_dtype)                             # (F, F)
    w2row = W2.reshape(1, F).astype(jnp.float32)            # (1, F), VPU path
    b1wt = b1w.T.astype(mm_dtype)                           # (2F, F)
    b1b2d = b1b.reshape(1, F).astype(jnp.float32)
    b2wt = b2w.T.astype(jnp.float32)                        # (F, 2)
    b2b2d = b2b.reshape(1, 2).astype(jnp.float32)

    s_in = s_i.astype(mm_dtype)
    vt_in = vt.astype(mm_dtype)

    packed = pl.pallas_call(
        gated_equivariant_kernel,
        out_shape=jax.ShapeDtypeStruct((N, 4), jnp.float32),
        grid=grid,
        in_specs=[
            pl.BlockSpec((TM, F), lambda i: (i, 0)),         # s        (tiled)
            pl.BlockSpec((3, TM, F), lambda i: (0, i, 0)),   # v_t      (tiled)
            pl.BlockSpec((F, F), lambda i: (0, 0)),          # W1.T     (resident)
            pl.BlockSpec((1, F), lambda i: (0, 0)),          # W2 row   (resident)
            pl.BlockSpec((2 * F, F), lambda i: (0, 0)),      # Dense1 W.T
            pl.BlockSpec((1, F), lambda i: (0, 0)),          # Dense1 bias
            pl.BlockSpec((F, 2), lambda i: (0, 0)),          # Dense2 W.T
            pl.BlockSpec((1, 2), lambda i: (0, 0)),          # Dense2 bias
        ],
        out_specs=pl.BlockSpec((TM, 4), lambda i: (i, 0)),   # [new_s, vx, vy, vz]
        compiler_params=pltpu.CompilerParams(
            dimension_semantics=("parallel",),
            vmem_limit_bytes=48 * 1024 * 1024),
    )(s_in, vt_in, w1t, w2row, b1wt, b1b2d, b2wt, b2b2d)

    new_s = packed[:, 0:1]
    new_v = packed[:, 1:4]
    return new_s, new_v


def gated_equivariant_reference(s_i, v_i, params):
    """Pure-JAX reference mirroring the PyTorch forward (v_i in (N, F, 3) layout)."""
    W1, W2, b1w, b1b, b2w, b2b = (params["W1"], params["W2"], params["b1w"],
                                  params["b1b"], params["b2w"], params["b2b"])
    w_v_1 = jnp.einsum('ij,kjl->kil', W1, v_i)              # (N, F, 3)
    w_v_2 = jnp.einsum('ij,kjl->kil', W2, v_i)              # (N, 1, 3)
    nrm = jnp.sqrt(((w_v_1 ** 2) + EPS).sum(-1))            # (N, F)
    cat_s = jnp.concatenate([nrm, s_i], axis=-1)            # (N, 2F)
    h = cat_s @ b1w.T + b1b
    h = h * jax.nn.sigmoid(h)
    out = h @ b2w.T + b2b                                   # (N, 2)
    new_v = out[:, :1] * w_v_2.reshape(-1, 3)               # (N, 3)
    new_s = out[:, 1:]                                      # (N, 1)
    return new_s, new_v


def make_params(feat_dim, key):
    ks = jax.random.split(key, 6)
    scale_f = 1.0 / jnp.sqrt(feat_dim)
    scale_2f = 1.0 / jnp.sqrt(2.0 * feat_dim)
    return {
        "W1": jax.random.normal(ks[0], (feat_dim, feat_dim), jnp.float32) * scale_f,
        "W2": jax.random.normal(ks[1], (1, feat_dim), jnp.float32) * scale_f,
        "b1w": jax.random.normal(ks[2], (feat_dim, 2 * feat_dim), jnp.float32) * scale_2f,
        "b1b": jax.random.normal(ks[3], (feat_dim,), jnp.float32) * 0.1,
        "b2w": jax.random.normal(ks[4], (2, feat_dim), jnp.float32) * scale_f,
        "b2b": jax.random.normal(ks[5], (2,), jnp.float32) * 0.1,
    }


if __name__ == "__main__":
    key = jax.random.PRNGKey(0)
    k_s, k_v, k_p, k_s2, k_v2, k_p2 = jax.random.split(key, 6)

    # --- small, module-consistent shapes -------------------------------------
    N, F = 8, 32
    s_i = jax.random.normal(k_s, (N, F), jnp.float32)
    v_i = jax.random.normal(k_v, (N, F, 3), jnp.float32)
    params = make_params(F, k_p)
    ref_s, ref_v = gated_equivariant_reference(s_i, v_i, params)

    # f32 MXU-input path: exact (tight tolerance)
    s32, v32 = gated_equivariant(s_i, v_i, params, mm_dtype=jnp.float32)
    jax.block_until_ready((s32, v32))
    assert s32.shape == (N, 1) and v32.shape == (N, 3)
    assert jnp.allclose(s32, ref_s, rtol=1e-4, atol=1e-4)
    assert jnp.allclose(v32, ref_v, rtol=1e-4, atol=1e-4)

    # default bf16 MXU-input path (f32 accumulation): loose tolerance vs f32 ref
    sbf, vbf = gated_equivariant(s_i, v_i, params)
    jax.block_until_ready((sbf, vbf))
    assert jnp.allclose(sbf, ref_s, rtol=5e-2, atol=5e-2)
    assert jnp.allclose(vbf, ref_v, rtol=5e-2, atol=5e-2)

    # pre-transposed (3, N, F) fast path (no wrapper-side HBM transpose)
    vt_pre = jnp.transpose(v_i, (2, 0, 1))
    s3, v3 = gated_equivariant(s_i, vt_pre, params, v_layout="3nf")
    jax.block_until_ready((s3, v3))
    assert jnp.allclose(s3, sbf, rtol=1e-6, atol=1e-6)
    assert jnp.allclose(v3, vbf, rtol=1e-6, atol=1e-6)

    # --- multi-tile grid, N not a multiple of the tile (no padding) -----------
    N2, F2 = 300, 128
    s_big = jax.random.normal(k_s2, (N2, F2), jnp.float32)
    v_big = jax.random.normal(k_v2, (N2, F2, 3), jnp.float32)
    params2 = make_params(F2, k_p2)
    rb_s, rb_v = gated_equivariant_reference(s_big, v_big, params2)

    sb32, vb32 = gated_equivariant(s_big, v_big, params2, mm_dtype=jnp.float32, tm=128)
    jax.block_until_ready((sb32, vb32))
    assert sb32.shape == (N2, 1) and vb32.shape == (N2, 3)
    assert jnp.allclose(sb32, rb_s, rtol=1e-4, atol=1e-4)
    assert jnp.allclose(vb32, rb_v, rtol=1e-4, atol=1e-4)

    # default (bf16, auto TM -> >=2 grid steps, partial last block) path
    sbb, vbb = gated_equivariant(s_big, v_big, params2)
    jax.block_until_ready((sbb, vbb))
    assert jnp.allclose(sbb, rb_s, rtol=5e-2, atol=5e-2)
    assert jnp.allclose(vbb, rb_v, rtol=5e-2, atol=5e-2)

    print("KERNEL_OK")
</pallas_src>

<mosaic_0001>
module attributes {stable_mosaic.version = 11 : i64} {
  func.func @gated_equivariant_kernel(%arg0: i32, %arg1: memref<8x32xf32, #tpu.memory_space<vmem>>, %arg2: memref<3x8x32xf32, #tpu.memory_space<vmem>>, %arg3: memref<32x32xf32, #tpu.memory_space<vmem>>, %arg4: memref<1x32xf32, #tpu.memory_space<vmem>>, %arg5: memref<64x32xf32, #tpu.memory_space<vmem>>, %arg6: memref<1x32xf32, #tpu.memory_space<vmem>>, %arg7: memref<32x2xf32, #tpu.memory_space<vmem>>, %arg8: memref<1x2xf32, #tpu.memory_space<vmem>>, %arg9: memref<8x4xf32, #tpu.memory_space<vmem>>) attributes {dimension_semantics = [#tpu.dimension_semantics<parallel>], iteration_bounds = array<i64: 1>, scalar_prefetch = 0 : i64, scratch_operands = 0 : i64, tpu.core_type = #tpu.core_type<tc>, window_params = [{transform_indices = @transform_0, window_bounds = array<i64: 8, 32>}, {transform_indices = @transform_1, window_bounds = array<i64: 3, 8, 32>}, {pipeline_mode = #tpu.pipeline_mode<synchronous>, transform_indices = @transform_2, window_bounds = array<i64: 32, 32>}, {pipeline_mode = #tpu.pipeline_mode<synchronous>, transform_indices = @transform_3, window_bounds = array<i64: 1, 32>}, {pipeline_mode = #tpu.pipeline_mode<synchronous>, transform_indices = @transform_4, window_bounds = array<i64: 64, 32>}, {pipeline_mode = #tpu.pipeline_mode<synchronous>, transform_indices = @transform_5, window_bounds = array<i64: 1, 32>}, {pipeline_mode = #tpu.pipeline_mode<synchronous>, transform_indices = @transform_6, window_bounds = array<i64: 32, 2>}, {pipeline_mode = #tpu.pipeline_mode<synchronous>, transform_indices = @transform_7, window_bounds = array<i64: 1, 2>}, {transform_indices = @transform_8, window_bounds = array<i64: 8, 4>}]} {
    %c0 = arith.constant 0 : index
    %c0_0 = arith.constant 0 : index
    %c0_1 = arith.constant 0 : index
    %0 = vector.load %arg2[%c0, %c0_0, %c0_1] : memref<3x8x32xf32, #tpu.memory_space<vmem>>, vector<3x8x32xf32>
    %1 = vector.shape_cast %0 : vector<3x8x32xf32> to vector<24x32xf32>
    %c0_2 = arith.constant 0 : index
    %c0_3 = arith.constant 0 : index
    %2 = vector.load %arg3[%c0_2, %c0_3] : memref<32x32xf32, #tpu.memory_space<vmem>>, vector<32x32xf32>
    %cst = arith.constant dense<0.000000e+00> : vector<24x32xf32>
    %3 = tpu.matmul %1, %2, %cst {dimension_numbers = #tpu.dot_dimension_numbers<[1], [0], [0], [1], [0, 0, 1, 1], [], []>} : vector<24x32xf32>, vector<32x32xf32>, vector<24x32xf32> -> vector<24x32xf32>
    %4 = vector.extract_strided_slice %3 {offsets = [0, 0], sizes = [8, 32], strides = [1, 1]} : vector<24x32xf32> to vector<8x32xf32>
    %5 = vector.extract_strided_slice %3 {offsets = [8, 0], sizes = [8, 32], strides = [1, 1]} : vector<24x32xf32> to vector<8x32xf32>
    %6 = vector.extract_strided_slice %3 {offsets = [16, 0], sizes = [8, 32], strides = [1, 1]} : vector<24x32xf32> to vector<8x32xf32>
    %7 = arith.mulf %4, %4 : vector<8x32xf32>
    %8 = arith.mulf %5, %5 : vector<8x32xf32>
    %9 = arith.addf %7, %8 : vector<8x32xf32>
    %10 = arith.mulf %6, %6 : vector<8x32xf32>
    %11 = arith.addf %9, %10 : vector<8x32xf32>
    %cst_4 = arith.constant 3.000000e-15 : f32
    %12 = vector.broadcast %cst_4 : f32 to vector<8x32xf32>
    %13 = arith.addf %11, %12 : vector<8x32xf32>
    %14 = math.sqrt %13 : vector<8x32xf32>
    %c0_5 = arith.constant 0 : index
    %c0_6 = arith.constant 0 : index
    %15 = vector.load %arg1[%c0_5, %c0_6] : memref<8x32xf32, #tpu.memory_space<vmem>>, vector<8x32xf32>
    %16 = tpu.concatenate %14, %15 in 1 : vector<8x32xf32>, vector<8x32xf32> -> vector<8x64xf32>
    %c0_7 = arith.constant 0 : index
    %c0_8 = arith.constant 0 : index
    %17 = vector.load %arg5[%c0_7, %c0_8] : memref<64x32xf32, #tpu.memory_space<vmem>>, vector<64x32xf32>
    %cst_9 = arith.constant dense<0.000000e+00> : vector<8x32xf32>
    %18 = tpu.matmul %16, %17, %cst_9 {dimension_numbers = #tpu.dot_dimension_numbers<[1], [0], [0], [1], [0, 0, 1, 1], [], []>} : vector<8x64xf32>, vector<64x32xf32>, vector<8x32xf32> -> vector<8x32xf32>
    %c0_10 = arith.constant 0 : index
    %c0_11 = arith.constant 0 : index
    %19 = vector.load %arg6[%c0_10, %c0_11] : memref<1x32xf32, #tpu.memory_space<vmem>>, vector<1x32xf32>
    %20 = vector.broadcast %19 : vector<1x32xf32> to vector<8x32xf32>
    %21 = arith.addf %18, %20 : vector<8x32xf32>
    %22 = arith.negf %21 : vector<8x32xf32>
    %23 = math.exp %22 : vector<8x32xf32>
    %cst_12 = arith.constant 1.000000e+00 : f32
    %24 = vector.broadcast %cst_12 : f32 to vector<8x32xf32>
    %25 = arith.addf %24, %23 : vector<8x32xf32>
    %26 = arith.divf %24, %25 : vector<8x32xf32>
    %27 = arith.mulf %21, %26 : vector<8x32xf32>
    %c0_13 = arith.constant 0 : index
    %c0_14 = arith.constant 0 : index
    %28 = vector.load %arg7[%c0_13, %c0_14] : memref<32x2xf32, #tpu.memory_space<vmem>>, vector<32x2xf32>
    %cst_15 = arith.constant dense<0.000000e+00> : vector<8x2xf32>
    %29 = tpu.matmul %27, %28, %cst_15 {dimension_numbers = #tpu.dot_dimension_numbers<[1], [0], [0], [1], [0, 0, 1, 1], [], []>} : vector<8x32xf32>, vector<32x2xf32>, vector<8x2xf32> -> vector<8x2xf32>
    %c0_16 = arith.constant 0 : index
    %c0_17 = arith.constant 0 : index
    %30 = vector.load %arg8[%c0_16, %c0_17] : memref<1x2xf32, #tpu.memory_space<vmem>>, vector<1x2xf32>
    %31 = vector.broadcast %30 : vector<1x2xf32> to vector<8x2xf32>
    %32 = arith.addf %29, %31 : vector<8x2xf32>
    %33 = vector.extract_strided_slice %32 {offsets = [0, 0], sizes = [8, 1], strides = [1, 1]} : vector<8x2xf32> to vector<8x1xf32>
    %34 = vector.extract_strided_slice %32 {offsets = [0, 1], sizes = [8, 1], strides = [1, 1]} : vector<8x2xf32> to vector<8x1xf32>
    %c0_18 = arith.constant 0 : index
    %c0_19 = arith.constant 0 : index
    %35 = vector.load %arg4[%c0_18, %c0_19] : memref<1x32xf32, #tpu.memory_space<vmem>>, vector<1x32xf32>
    %36 = vector.extract_strided_slice %0 {offsets = [0, 0, 0], sizes = [1, 8, 32], strides = [1, 1, 1]} : vector<3x8x32xf32> to vector<1x8x32xf32>
    %37 = vector.shape_cast %36 : vector<1x8x32xf32> to vector<8x32xf32>
    %38 = vector.broadcast %35 : vector<1x32xf32> to vector<8x32xf32>
    %39 = arith.mulf %37, %38 : vector<8x32xf32>
    %cst_20 = arith.constant dense<0.000000e+00> : vector<8xf32>
    %40 = vector.multi_reduction <add>, %39, %cst_20 [1] : vector<8x32xf32> to vector<8xf32>
    %41 = vector.shape_cast %40 : vector<8xf32> to vector<8x1xf32>
    %42 = vector.extract_strided_slice %0 {offsets = [1, 0, 0], sizes = [1, 8, 32], strides = [1, 1, 1]} : vector<3x8x32xf32> to vector<1x8x32xf32>
    %43 = vector.shape_cast %42 : vector<1x8x32xf32> to vector<8x32xf32>
    %44 = vector.broadcast %35 : vector<1x32xf32> to vector<8x32xf32>
    %45 = arith.mulf %43, %44 : vector<8x32xf32>
    %cst_21 = arith.constant dense<0.000000e+00> : vector<8xf32>
    %46 = vector.multi_reduction <add>, %45, %cst_21 [1] : vector<8x32xf32> to vector<8xf32>
    %47 = vector.shape_cast %46 : vector<8xf32> to vector<8x1xf32>
    %48 = vector.extract_strided_slice %0 {offsets = [2, 0, 0], sizes = [1, 8, 32], strides = [1, 1, 1]} : vector<3x8x32xf32> to vector<1x8x32xf32>
    %49 = vector.shape_cast %48 : vector<1x8x32xf32> to vector<8x32xf32>
    %50 = vector.broadcast %35 : vector<1x32xf32> to vector<8x32xf32>
    %51 = arith.mulf %49, %50 : vector<8x32xf32>
    %cst_22 = arith.constant dense<0.000000e+00> : vector<8xf32>
    %52 = vector.multi_reduction <add>, %51, %cst_22 [1] : vector<8x32xf32> to vector<8xf32>
    %53 = vector.shape_cast %52 : vector<8xf32> to vector<8x1xf32>
    %54 = tpu.concatenate %41, %47, %53 in 1 : vector<8x1xf32>, vector<8x1xf32>, vector<8x1xf32> -> vector<8x3xf32>
    %55 = vector.broadcast %33 : vector<8x1xf32> to vector<8x3xf32>
    %56 = arith.mulf %55, %54 : vector<8x3xf32>
    %57 = tpu.concatenate %34, %56 in 1 : vector<8x1xf32>, vector<8x3xf32> -> vector<8x4xf32>
    %c0_23 = arith.constant 0 : index
    %c0_24 = arith.constant 0 : index
    %58 = vector.load %arg9[%c0_23, %c0_24] : memref<8x4xf32, #tpu.memory_space<vmem>>, vector<8x4xf32>
    tpu.vector_store %arg9[%c0_23, %c0_24], %57 {strides = array<i32>} : memref<8x4xf32, #tpu.memory_space<vmem>>, vector<8x4xf32>,
    return
  }
  func.func @transform_0(%arg0: i32) -> (i32, i32) {
    %c0_i32 = arith.constant 0 : i32
    %c0_i32_0 = arith.constant 0 : i32
    return %arg0, %c0_i32 : i32, i32
  }
  func.func @transform_1(%arg0: i32) -> (i32, i32, i32) {
    %c0_i32 = arith.constant 0 : i32
    %c0_i32_0 = arith.constant 0 : i32
    %c0_i32_1 = arith.constant 0 : i32
    return %c0_i32, %arg0, %c0_i32_0 : i32, i32, i32
  }
  func.func @transform_2(%arg0: i32) -> (i32, i32) {
    %c0_i32 = arith.constant 0 : i32
    %c0_i32_0 = arith.constant 0 : i32
    %c0_i32_1 = arith.constant 0 : i32
    return %c0_i32, %c0_i32_0 : i32, i32
  }
  func.func @transform_3(%arg0: i32) -> (i32, i32) {
    %c0_i32 = arith.constant 0 : i32
    %c0_i32_0 = arith.constant 0 : i32
    %c0_i32_1 = arith.constant 0 : i32
    return %c0_i32, %c0_i32_0 : i32, i32
  }
  func.func @transform_4(%arg0: i32) -> (i32, i32) {
    %c0_i32 = arith.constant 0 : i32
    %c0_i32_0 = arith.constant 0 : i32
    %c0_i32_1 = arith.constant 0 : i32
    return %c0_i32, %c0_i32_0 : i32, i32
  }
  func.func @transform_5(%arg0: i32) -> (i32, i32) {
    %c0_i32 = arith.constant 0 : i32
    %c0_i32_0 = arith.constant 0 : i32
    %c0_i32_1 = arith.constant 0 : i32
    return %c0_i32, %c0_i32_0 : i32, i32
  }
  func.func @transform_6(%arg0: i32) -> (i32, i32) {
    %c0_i32 = arith.constant 0 : i32
    %c0_i32_0 = arith.constant 0 : i32
    %c0_i32_1 = arith.constant 0 : i32
    return %c0_i32, %c0_i32_0 : i32, i32
  }
  func.func @transform_7(%arg0: i32) -> (i32, i32) {
    %c0_i32 = arith.constant 0 : i32
    %c0_i32_0 = arith.constant 0 : i32
    %c0_i32_1 = arith.constant 0 : i32
    return %c0_i32, %c0_i32_0 : i32, i32
  }
  func.func @transform_8(%arg0: i32) -> (i32, i32) {
    %c0_i32 = arith.constant 0 : i32
    %c0_i32_0 = arith.constant 0 : i32
    return %arg0, %c0_i32 : i32, i32
  }
}

</mosaic_0001>

<llo_original>
// kernel: gated_equivariant.1
$region0: #{gated_equivariant.1}
  #allocation0 [shape = 'u32[]', space=smem, size = 0x4, offset = 0x4, fixed_abs, tag = 'smem constant byte address 0x4 - core index']
  #allocation1 [shape = 'u32[144,128]{1,0:T(1,128)}', space=vmem, size = 0x12000, scoped, tag = 'internal scratch']
  %s0 = inlined_call_operand.vmem [shape: f32[8,32], index: 0, kind: input, shape index: {}]
  %s1 = inlined_call_operand.vmem [shape: f32[3,8,32], index: 1, kind: input, shape index: {}]
  %s2 = inlined_call_operand.vmem [shape: f32[32,32], index: 2, kind: input, shape index: {}]
  %s3 = inlined_call_operand.vmem [shape: f32[1,32], index: 3, kind: input, shape index: {}]
  %s4 = inlined_call_operand.vmem [shape: f32[64,32], index: 4, kind: input, shape index: {}]
  %s5 = inlined_call_operand.vmem [shape: f32[1,32], index: 5, kind: input, shape index: {}]
  %s6 = inlined_call_operand.vmem [shape: f32[32,2], index: 6, kind: input, shape index: {}]
  %s7 = inlined_call_operand.vmem [shape: f32[1,2], index: 7, kind: input, shape index: {}]
  %s8 = inlined_call_operand.vmem [shape: f32[8,4], index: 8, kind: output, shape index: {}]
  %s9 = sld [smem:[#allocation0]]
  $region42: #{gated_equivariant.1} parent=0
    _
  %s11 = ssub.s32 1, %s9
  %s12 = scalar_select 0, %s11, %s9
  // Predicated region
  $region2: #{gated_equivariant.1} parent=0 // pred_check
    _
  $region3: #{gated_equivariant.1} parent=0 // pred_check_branch
    %14 = sbr.rel (0) target = $region5
  $region4: #{gated_equivariant.1} parent=0 // pred_region
    _
  $region5: #{gated_equivariant.1} parent=0 // pred_fallthru
    _
  // Predicated region
  $region6: #{gated_equivariant.1} parent=0 // pred_check
    _
  $region7: #{gated_equivariant.1} parent=0 // pred_check_branch
    %16 = sbr.rel (0) target = $region9
  $region8: #{gated_equivariant.1} parent=0 // pred_region
    _
  $region9: #{gated_equivariant.1} parent=0 // pred_fallthru
    _
  // Predicated region
  $region10: #{gated_equivariant.1} parent=0 // pred_check
    _
  $region11: #{gated_equivariant.1} parent=0 // pred_check_branch
    %18 = sbr.rel (0) target = $region13
  $region12: #{gated_equivariant.1} parent=0 // pred_region
    _
  $region13: #{gated_equivariant.1} parent=0 // pred_fallthru
    _
  // Predicated region
  $region14: #{gated_equivariant.1} parent=0 // pred_check
    _
  $region15: #{gated_equivariant.1} parent=0 // pred_check_branch
    %20 = sbr.rel (0) target = $region17
  $region16: #{gated_equivariant.1} parent=0 // pred_region
    _
  $region17: #{gated_equivariant.1} parent=0 // pred_fallthru
    _
  // Predicated region
  $region18: #{gated_equivariant.1} parent=0 // pred_check
    _
  $region19: #{gated_equivariant.1} parent=0 // pred_check_branch
    %22 = sbr.rel (0) target = $region21
  $region20: #{gated_equivariant.1} parent=0 // pred_region
    _
  $region21: #{gated_equivariant.1} parent=0 // pred_fallthru
    _
  // Predicated region
  $region22: #{gated_equivariant.1} parent=0 // pred_check
    _
  $region23: #{gated_equivariant.1} parent=0 // pred_check_branch
    %24 = sbr.rel (0) target = $region25
  $region24: #{gated_equivariant.1} parent=0 // pred_region
    _
  $region25: #{gated_equivariant.1} parent=0 // pred_fallthru
    _
  // Predicated region
  $region26: #{gated_equivariant.1} parent=0 // pred_check
    _
  $region27: #{gated_equivariant.1} parent=0 // pred_check_branch
    %26 = sbr.rel (0) target = $region29
  $region28: #{gated_equivariant.1} parent=0 // pred_region
    _
  $region29: #{gated_equivariant.1} parent=0 // pred_fallthru
    _
  // Predicated region
  $region30: #{gated_equivariant.1} parent=0 // pred_check
    _
  $region31: #{gated_equivariant.1} parent=0 // pred_check_branch
    %28 = sbr.rel (0) target = $region33
  $region32: #{gated_equivariant.1} parent=0 // pred_region
    _
  $region33: #{gated_equivariant.1} parent=0 // pred_fallthru
    _
  %v29 = vld [vmem:[%s1] sm:$0xff]
  %v30 = vld [vmem:[%s1 + $0x8] sm:$0xff]
  %v31 = vld [vmem:[%s1 + $0x10] sm:$0xff]
  %v32 = vld [vmem:[%s2] sm:$0xff]
  %v33 = vld [vmem:[%s2 + $0x8] sm:$0xff]
  %v34 = vld [vmem:[%s2 + $0x10] sm:$0xff]
  %v35 = vld [vmem:[%s2 + $0x18] sm:$0xff]
  %vm36 = vcmask 261120
  %v38 = vsel %vm36, %v29, 0
  %v41 = vsel %vm36, %v30, 0
  %v44 = vsel %vm36, %v31, 0
  %46 = vmatprep.subr.mxu0 0.0
  %47 = vmatpush1.msra.mxu0 0.0
  %48 = vmatprep.subr.mxu0 0.0
  %49 = vmatpush1.msra.mxu0 0.0
  %50 = vmatprep.subr.mxu0 0.0
  %51 = vmatpush1.msra.mxu0 0.0
  %52 = vmatprep.subr.mxu0 0.0
  %53 = vmatpush1.msra.mxu0 0.0
  %54 = vmatprep.subr.mxu0 0.0
  %55 = vmatpush1.msra.mxu0 0.0
  %56 = vmatprep.subr.mxu0 0.0
  %57 = vmatpush1.msra.mxu0 0.0
  %58 = vmatprep.subr.mxu0 0.0
  %59 = vmatpush1.msra.mxu0 0.0
  %60 = vmatprep.subr.mxu0 0.0
  %61 = vmatpush1.msra.mxu0 0.0
  %62 = vmatprep.subr.mxu0 0.0
  %63 = vmatpush1.msra.mxu0 0.0
  %64 = vmatprep.subr.mxu0 0.0
  %65 = vmatpush1.msra.mxu0 0.0
  %66 = vmatprep.subr.mxu0 0.0
  %67 = vmatpush1.msra.mxu0 0.0
  %68 = vmatprep.subr.mxu0 0.0
  %69 = vmatpush1.msra.mxu0 0.0
  %70 = vmatprep.subr.mxu0 0.0
  %71 = vmatpush1.msra.mxu0 %v35
  %72 = vmatprep.subr.mxu0 0.0
  %73 = vmatpush1.msra.mxu0 %v34
  %74 = vmatprep.subr.mxu0 0.0
  %75 = vmatpush1.msra.mxu0 %v33
  %76 = vmatprep.subr.mxu0 0.0
  %77 = vmatpush1.msra.mxu0 %v32
  %78 = vmatprep.subr.mxu0 0.0
  %79 = vmatpush2.msra.mxu0 0.0
  %80 = vmatprep.subr.mxu0 0.0
  %81 = vmatpush2.msra.mxu0 0.0
  %82 = vmatprep.subr.mxu0 0.0
  %83 = vmatpush2.msra.mxu0 0.0
  %84 = vmatprep.subr.mxu0 0.0
  %85 = vmatpush2.msra.mxu0 0.0
  %86 = vmatprep.subr.mxu0 0.0
  %87 = vmatpush2.msra.mxu0 0.0
  %88 = vmatprep.subr.mxu0 0.0
  %89 = vmatpush2.msra.mxu0 0.0
  %90 = vmatprep.subr.mxu0 0.0
  %91 = vmatpush2.msra.mxu0 0.0
  %92 = vmatprep.subr.mxu0 0.0
  %93 = vmatpush2.msra.mxu0 0.0
  %94 = vmatprep.subr.mxu0 0.0
  %95 = vmatpush2.msra.mxu0 0.0
  %96 = vmatprep.subr.mxu0 0.0
  %97 = vmatpush2.msra.mxu0 0.0
  %98 = vmatprep.subr.mxu0 0.0
  %99 = vmatpush2.msra.mxu0 0.0
  %100 = vmatprep.subr.mxu0 0.0
  %101 = vmatpush2.msra.mxu0 0.0
  %102 = vmatprep.subr.mxu0 0.0
  %103 = vmatpush2.msra.mxu0 0.0
  %104 = vmatprep.subr.mxu0 0.0
  %105 = vmatpush2.msra.mxu0 0.0
  %106 = vmatprep.subr.mxu0 0.0
  %107 = vmatpush2.msra.mxu0 0.0
  %108 = vmatprep.subr.mxu0 0.0
  %109 = vmatpush2.msra.mxu0 0.0
  %110 = vmatprep.mubr.f32.mxu0 0.0
  %111 = vmatmul.mubr.f32.gmra.mxu0 %v38
  %v112 = vpop.f32.mrf.mxu0
  %v113 = vadd.f32 0.0, %v112
  %v114 = vpop.f32.mrf.mxu0
  %115 = vmatprep.mubr.f32.mxu0 0.0
  %116 = vmatmul.mubr.f32.gmra.mxu0 %v41
  %v117 = vpop.f32.mrf.mxu0
  %v118 = vadd.f32 0.0, %v117
  %v119 = vpop.f32.mrf.mxu0
  %120 = vmatprep.mubr.f32.mxu0 0.0
  %121 = vmatmul.mubr.f32.gmra.mxu0 %v44
  %v122 = vpop.f32.mrf.mxu0
  %v123 = vadd.f32 0.0, %v122
  %v124 = vpop.f32.mrf.mxu0
  %125 = vdwg.mxu0
  %v126 = vmul.f32 %v113, %v113
  %v127 = vmul.f32 %v118, %v118
  %v128 = vadd.f32 %v126, %v127
  %v129 = vmul.f32 %v123, %v123
  %v130 = vadd.f32 %v128, %v129
  %v131 = vadd.f32 %v130, 3e-15
  %v132 = vrsqrt.pop %v131
  %v133 = vmul.f32 %v131, %v132
  %vm134 = vcmp.eq.f32.partialorder %v131, inf
  %v135 = vsel %vm134, %v131, %v133
  %vm136 = vcmp.eq.f32.partialorder %v131, 0.0
  %v137 = vand.u32 %v131, 2147483648
  %v138 = vsel %vm136, %v137, %v135
  %v139 = vld [vmem:[%s0] sm:$0xff]
  %141 = vrot.lane.b32.xlu0 %v139, 32
  %v142 = vpop.permute.xlu0 %141
  %v144 = vsel %vm36, %v138, %v142
  %v145 = vld [vmem:[%s4] sm:$0xff]
  %v146 = vld [vmem:[%s4 + $0x8] sm:$0xff]
  %v147 = vld [vmem:[%s4 + $0x10] sm:$0xff]
  %v148 = vld [vmem:[%s4 + $0x18] sm:$0xff]
  %v149 = vld [vmem:[%s4 + $0x20] sm:$0xff]
  %v150 = vld [vmem:[%s4 + $0x28] sm:$0xff]
  %v151 = vld [vmem:[%s4 + $0x30] sm:$0xff]
  %v152 = vld [vmem:[%s4 + $0x38] sm:$0xff]
  %v153 = vld [vmem:[%s5] sm:$0x1]
  %v155 = vlaneseq
  %v156 = vshrl.u32 %v155, 7
  %v157 = vsub.s32 0, %v156
  %v158 = vrot.slane %v153, %v157
  %vm160 = vcmask 523264
  %v162 = vsel %vm160, %v144, 0
  %164 = vmatprep.subr.mxu0 0.0
  %165 = vmatpush1.msra.mxu0 0.0
  %166 = vmatprep.subr.mxu0 0.0
  %167 = vmatpush1.msra.mxu0 0.0
  %168 = vmatprep.subr.mxu0 0.0
  %169 = vmatpush1.msra.mxu0 0.0
  %170 = vmatprep.subr.mxu0 0.0
  %171 = vmatpush1.msra.mxu0 0.0
  %172 = vmatprep.subr.mxu0 0.0
  %173 = vmatpush1.msra.mxu0 0.0
  %174 = vmatprep.subr.mxu0 0.0
  %175 = vmatpush1.msra.mxu0 0.0
  %176 = vmatprep.subr.mxu0 0.0
  %177 = vmatpush1.msra.mxu0 0.0
  %178 = vmatprep.subr.mxu0 0.0
  %179 = vmatpush1.msra.mxu0 0.0
  %180 = vmatprep.subr.mxu0 0.0
  %181 = vmatpush1.msra.mxu0 %v152
  %182 = vmatprep.subr.mxu0 0.0
  %183 = vmatpush1.msra.mxu0 %v151
  %184 = vmatprep.subr.mxu0 0.0
  %185 = vmatpush1.msra.mxu0 %v150
  %186 = vmatprep.subr.mxu0 0.0
  %187 = vmatpush1.msra.mxu0 %v149
  %188 = vmatprep.subr.mxu0 0.0
  %189 = vmatpush1.msra.mxu0 %v148
  %190 = vmatprep.subr.mxu0 0.0
  %191 = vmatpush1.msra.mxu0 %v147
  %192 = vmatprep.subr.mxu0 0.0
  %193 = vmatpush1.msra.mxu0 %v146
  %194 = vmatprep.subr.mxu0 0.0
  %195 = vmatpush1.msra.mxu0 %v145
  %196 = vmatprep.subr.mxu0 0.0
  %197 = vmatpush2.msra.mxu0 0.0
  %198 = vmatprep.subr.mxu0 0.0
  %199 = vmatpush2.msra.mxu0 0.0
  %200 = vmatprep.subr.mxu0 0.0
  %201 = vmatpush2.msra.mxu0 0.0
  %202 = vmatprep.subr.mxu0 0.0
  %203 = vmatpush2.msra.mxu0 0.0
  %204 = vmatprep.subr.mxu0 0.0
  %205 = vmatpush2.msra.mxu0 0.0
  %206 = vmatprep.subr.mxu0 0.0
  %207 = vmatpush2.msra.mxu0 0.0
  %208 = vmatprep.subr.mxu0 0.0
  %209 = vmatpush2.msra.mxu0 0.0
  %210 = vmatprep.subr.mxu0 0.0
  %211 = vmatpush2.msra.mxu0 0.0
  %212 = vmatprep.subr.mxu0 0.0
  %213 = vmatpush2.msra.mxu0 0.0
  %214 = vmatprep.subr.mxu0 0.0
  %215 = vmatpush2.msra.mxu0 0.0
  %216 = vmatprep.subr.mxu0 0.0
  %217 = vmatpush2.msra.mxu0 0.0
  %218 = vmatprep.subr.mxu0 0.0
  %219 = vmatpush2.msra.mxu0 0.0
  %220 = vmatprep.subr.mxu0 0.0
  %221 = vmatpush2.msra.mxu0 0.0
  %222 = vmatprep.subr.mxu0 0.0
  %223 = vmatpush2.msra.mxu0 0.0
  %224 = vmatprep.subr.mxu0 0.0
  %225 = vmatpush2.msra.mxu0 0.0
  %226 = vmatprep.subr.mxu0 0.0
  %227 = vmatpush2.msra.mxu0 0.0
  %228 = vmatprep.mubr.f32.mxu0 0.0
  %229 = vmatmul.mubr.f32.gmra.mxu0 %v162
  %v230 = vpop.f32.mrf.mxu0
  %v231 = vadd.f32 %v158, %v230
  %v232 = vpop.f32.mrf.mxu0
  %233 = vdwg.mxu0
  %v234 = vxor.u32 %v231, 2147483648
  %v235 = vmul.f32 %v234, 1.442695
  %v236 = vpow.pop %v235
  %v237 = vadd.f32 %v236, 1.0
  %v238 = vrcp.pop %v237
  %v239 = vmul.f32 1.0, %v238
  %v240 = vmul.f32 %v231, %v239
  %v241 = vld [vmem:[%s6] sm:$0xff]
  %v242 = vld [vmem:[%s6 + $0x8] sm:$0xff]
  %v243 = vld [vmem:[%s6 + $0x10] sm:$0xff]
  %v244 = vld [vmem:[%s6 + $0x18] sm:$0xff]
  %v245 = vld [vmem:[%s7] sm:$0x1]
  %v247 = vlaneseq
  %v248 = vshrl.u32 %v247, 7
  %v249 = vsub.s32 0, %v248
  %v250 = vrot.slane %v245, %v249
  %v253 = vsel %vm36, %v240, 0
  %255 = vmatprep.subr.mxu0 0.0
  %256 = vmatpush1.msra.mxu0 0.0
  %257 = vmatprep.subr.mxu0 0.0
  %258 = vmatpush1.msra.mxu0 0.0
  %259 = vmatprep.subr.mxu0 0.0
  %260 = vmatpush1.msra.mxu0 0.0
  %261 = vmatprep.subr.mxu0 0.0
  %262 = vmatpush1.msra.mxu0 0.0
  %263 = vmatprep.subr.mxu0 0.0
  %264 = vmatpush1.msra.mxu0 0.0
  %265 = vmatprep.subr.mxu0 0.0
  %266 = vmatpush1.msra.mxu0 0.0
  %267 = vmatprep.subr.mxu0 0.0
  %268 = vmatpush1.msra.mxu0 0.0
  %269 = vmatprep.subr.mxu0 0.0
  %270 = vmatpush1.msra.mxu0 0.0
  %271 = vmatprep.subr.mxu0 0.0
  %272 = vmatpush1.msra.mxu0 0.0
  %273 = vmatprep.subr.mxu0 0.0
  %274 = vmatpush1.msra.mxu0 0.0
  %275 = vmatprep.subr.mxu0 0.0
  %276 = vmatpush1.msra.mxu0 0.0
  %277 = vmatprep.subr.mxu0 0.0
  %278 = vmatpush1.msra.mxu0 0.0
  %279 = vmatprep.subr.mxu0 0.0
  %280 = vmatpush1.msra.mxu0 %v244
  %281 = vmatprep.subr.mxu0 0.0
  %282 = vmatpush1.msra.mxu0 %v243
  %283 = vmatprep.subr.mxu0 0.0
  %284 = vmatpush1.msra.mxu0 %v242
  %285 = vmatprep.subr.mxu0 0.0
  %286 = vmatpush1.msra.mxu0 %v241
  %287 = vmatprep.subr.mxu0 0.0
  %288 = vmatpush2.msra.mxu0 0.0
  %289 = vmatprep.subr.mxu0 0.0
  %290 = vmatpush2.msra.mxu0 0.0
  %291 = vmatprep.subr.mxu0 0.0
  %292 = vmatpush2.msra.mxu0 0.0
  %293 = vmatprep.subr.mxu0 0.0
  %294 = vmatpush2.msra.mxu0 0.0
  %295 = vmatprep.subr.mxu0 0.0
  %296 = vmatpush2.msra.mxu0 0.0
  %297 = vmatprep.subr.mxu0 0.0
  %298 = vmatpush2.msra.mxu0 0.0
  %299 = vmatprep.subr.mxu0 0.0
  %300 = vmatpush2.msra.mxu0 0.0
  %301 = vmatprep.subr.mxu0 0.0
  %302 = vmatpush2.msra.mxu0 0.0
  %303 = vmatprep.subr.mxu0 0.0
  %304 = vmatpush2.msra.mxu0 0.0
  %305 = vmatprep.subr.mxu0 0.0
  %306 = vmatpush2.msra.mxu0 0.0
  %307 = vmatprep.subr.mxu0 0.0
  %308 = vmatpush2.msra.mxu0 0.0
  %309 = vmatprep.subr.mxu0 0.0
  %310 = vmatpush2.msra.mxu0 0.0
  %311 = vmatprep.subr.mxu0 0.0
  %312 = vmatpush2.msra.mxu0 0.0
  %313 = vmatprep.subr.mxu0 0.0
  %314 = vmatpush2.msra.mxu0 0.0
  %315 = vmatprep.subr.mxu0 0.0
  %316 = vmatpush2.msra.mxu0 0.0
  %317 = vmatprep.subr.mxu0 0.0
  %318 = vmatpush2.msra.mxu0 0.0
  %319 = vmatprep.mubr.f32.mxu0 0.0
  %320 = vmatmul.mubr.f32.gmra.mxu0 %v253
  %v321 = vpop.f32.mrf.mxu0
  %v322 = vadd.f32 %v250, %v321
  %v323 = vpop.f32.mrf.mxu0
  %324 = vdwg.mxu0
  %v325 = vld [vmem:[%s3] sm:$0x1]
  %v327 = vlaneseq
  %v328 = vshrl.u32 %v327, 7
  %v329 = vsub.s32 0, %v328
  %v330 = vrot.slane %v325, %v329
  %v332 = vmul.f32 %v29, %v330
  %v333 = vsel %vm36, %v332, 0.0
  %334 = vadd.xlane.f32.xlu0 %v333
  %v335 = vpop.xlane.xlu0 %334
  %v336 = vmul.f32 %v30, %v330
  %v337 = vsel %vm36, %v336, 0.0
  %338 = vadd.xlane.f32.xlu0 %v337
  %v339 = vpop.xlane.xlu0 %338
  %v340 = vmul.f32 %v31, %v330
  %v341 = vsel %vm36, %v340, 0.0
  %342 = vadd.xlane.f32.xlu0 %v341
  %v343 = vpop.xlane.xlu0 %342
  %vm344 = vcmask 7168
  %v345 = vsel %vm344, %v335, %v339
  %vm346 = vcmask 15360
  %v347 = vsel %vm346, %v345, %v343
  %349 = vset.pattern.permute.xlu0 0
  %350 = vperm.xlu0 %349, %v322
  %v351 = vpop.permute.xlu0 %350
  %v353 = vmul.f32 %v351, %v347
  %354 = vrot.lane.b32.xlu0 %v322, 127
  %v355 = vpop.permute.xlu0 %354
  %358 = vrot.lane.b32.xlu0 %v353, 1
  %v359 = vpop.permute.xlu0 %358
  %v361 = vsel %vm344, %v355, %v359
  %vm362 = vcmask 31744
  %363 = vst.msk [vmem:[%s8] sm:$0xff] %vm362, %v361
  // Predicated region
  $region34: #{gated_equivariant.1} parent=0 // pred_check
    _
  $region35: #{gated_equivariant.1} parent=0 // pred_check_branch
    %365 = sbr.rel (0) target = $region37
  $region36: #{gated_equivariant.1} parent=0 // pred_region
    _
  $region37: #{gated_equivariant.1} parent=0 // pred_fallthru
    _
  // Predicated region
  $region38: #{gated_equivariant.1} parent=0 // pred_check
    _
  $region39: #{gated_equivariant.1} parent=0 // pred_check_branch
    %367 = sbr.rel (0) target = $region41
  $region40: #{gated_equivariant.1} parent=0 // pred_region
    _
  $region41: #{gated_equivariant.1} parent=0 // pred_fallthru
    _

</llo_original>
